<compile_context>
chip_gen: v7x
topology: tpu7x:2x2x1
jax: 0.10.0
libtpu: 0.0.40
codegen_flags: <defaults>
</compile_context>

<pallas_src>
import functools

import jax
import jax.numpy as jnp
from jax.experimental import pallas as pl
from jax.experimental.pallas import tpu as pltpu


def _elu(x):
    # ELU(alpha=1): x if x > 0 else exp(x) - 1
    return jnp.where(x > 0, x, jnp.exp(x) - 1.0)


# --------------------------------------------------------------------------
# Kernel 1: fused projection  proj = h @ W_aug + b_aug
#   columns: [ Wh (all heads) | e_src (per head) | e_dst (per head) ]
# --------------------------------------------------------------------------
def gat_project_kernel(h_ref, w_ref, b_ref, proj_ref):
    proj_ref[...] = (
        jnp.dot(h_ref[...], w_ref[...], preferred_element_type=jnp.float32)
        + b_ref[...])


# --------------------------------------------------------------------------
# Kernel 2: fused multi-head attention, tiled over query-node rows.
#   adj_ref : [TQ, N]  int8 adjacency row tile (>0 means edge)
#   esrc_ref: [TQ, H]  per-row src attention logits (f32)
#   edst_ref: [H, N]   lane-major dst attention logits (f32, grid-invariant)
#   wh_ref  : [N, HF]  projected features, bf16 (grid-invariant)
#   res_ref : [TQ, HF] optional residual tile (out layer only)
#   out_ref : [TQ, HF]
# --------------------------------------------------------------------------
def gat_attention_kernel(adj_ref, esrc_ref, edst_ref, wh_ref, *rest,
                         nheads, fhead, alpha, fuse_residual, exact_softmax):
    if fuse_residual:
        res_ref, out_ref = rest
    else:
        (out_ref,) = rest

    edge = adj_ref[...].astype(jnp.int32) > 0          # [TQ, N] mask
    neg = jnp.float32(-9e15)
    e_src = esrc_ref[...]                               # [TQ, H]
    e_dst = edst_ref[...]                               # [H, N]

    for hh in range(nheads):                            # static unroll
        # e[i, j] = LeakyReLU(a_src.Wh[i] + a_dst.Wh[j] + a_b)
        e = e_src[:, hh:hh + 1] + e_dst[hh:hh + 1, :]   # [TQ, N]
        e = jnp.where(e > 0, e, alpha * e)              # LeakyReLU
        e = jnp.where(edge, e, neg)                     # adjacency mask
        e = e - jnp.max(e, axis=1, keepdims=True)       # stable softmax
        p = jnp.exp(e)
        denom = jnp.sum(p, axis=1, keepdims=True)
        p = p * pl.reciprocal(denom, approx=not exact_softmax)
        # Per-head RHS sliced straight from the grid-invariant bf16 ref.
        acc = jnp.dot(p.astype(jnp.bfloat16),
                      wh_ref[:, hh * fhead:(hh + 1) * fhead],
                      preferred_element_type=jnp.float32)   # [TQ, fhead]
        act = _elu(acc)                                  # F.elu (concat / out)
        if fuse_residual:
            act = act + res_ref[:, hh * fhead:(hh + 1) * fhead]
        out_ref[:, hh * fhead:(hh + 1) * fhead] = act    # direct slice write


# --------------------------------------------------------------------------
# Wrapper: one (multi-head) GraphAttentionLayer = projection call + attention call
# --------------------------------------------------------------------------
def gat_attention_layer(h, adj_i8, w_aug, b_aug, *, nheads, fhead, alpha,
                        residual=None, tq=None, tp=None, exact_softmax=False):
    n, fin = h.shape
    hf = nheads * fhead
    ncols = hf + 2 * nheads

    # ---- fused projection (row-tiled, megacore-parallel) --------------------
    if tp is None:
        tp = n if n <= 512 else 512
    assert n % tp == 0 and (tp == n or tp % 8 == 0)
    proj = pl.pallas_call(
        gat_project_kernel,
        out_shape=jax.ShapeDtypeStruct((n, ncols), jnp.float32),
        grid=(n // tp,),
        in_specs=[
            pl.BlockSpec((tp, fin), lambda i: (i, 0)),
            pl.BlockSpec((fin, ncols), lambda i: (0, 0)),
            pl.BlockSpec((1, ncols), lambda i: (0, 0)),
        ],
        out_specs=pl.BlockSpec((tp, ncols), lambda i: (i, 0)),
        compiler_params=pltpu.CompilerParams(
            dimension_semantics=("parallel",)),
    )(h, w_aug, b_aug)

    wh = proj[:, :hf].astype(jnp.bfloat16)             # [N, HF] bf16 MXU operand
    e_src = proj[:, hf:hf + nheads]                    # [N, H]  f32
    e_dst_t = jnp.transpose(proj[:, hf + nheads:])     # [H, N]  tiny lane-major transpose

    # ---- attention (row tiles, parallel grid axis) ---------------------------
    if tq is None:
        tq = n if n <= 256 else 256                    # larger tiles on v5e/v6e
    assert n % tq == 0 and (tq == n or tq % 32 == 0)   # int8 adj sublane tile
    grid = (n // tq,)

    kernel = functools.partial(
        gat_attention_kernel, nheads=nheads, fhead=fhead, alpha=float(alpha),
        fuse_residual=residual is not None, exact_softmax=exact_softmax)

    in_specs = [
        pl.BlockSpec((tq, n), lambda i: (i, 0)),          # adj row tile (int8)
        pl.BlockSpec((tq, nheads), lambda i: (i, 0)),     # e_src row tile
        pl.BlockSpec((nheads, n), lambda i: (0, 0)),      # e_dst (invariant)
        pl.BlockSpec((n, hf), lambda i: (0, 0)),          # Wh bf16 (invariant)
    ]
    args = [adj_i8, e_src, e_dst_t, wh]
    if residual is not None:
        in_specs.append(pl.BlockSpec((tq, hf), lambda i: (i, 0)))
        args.append(residual)

    return pl.pallas_call(
        kernel,
        out_shape=jax.ShapeDtypeStruct((n, hf), jnp.float32),
        grid=grid,
        in_specs=in_specs,
        out_specs=pl.BlockSpec((tq, hf), lambda i: (i, 0)),
        compiler_params=pltpu.CompilerParams(
            dimension_semantics=("parallel",)),           # no cross-tile state
    )(*args)


# --------------------------------------------------------------------------
# Parameter handling
# --------------------------------------------------------------------------
def init_layer_params(key, in_features, out_features):
    """Deterministic params matching nn.Linear shapes of GraphAttentionLayer."""
    k1, k2, k3, k4 = jax.random.split(key, 4)
    bw = 1.0 / jnp.sqrt(jnp.float32(in_features))
    ba = 1.0 / jnp.sqrt(jnp.float32(2 * out_features))
    return {
        "w": jax.random.uniform(k1, (out_features, in_features), jnp.float32, -bw, bw),
        "w_b": jax.random.uniform(k2, (out_features,), jnp.float32, -bw, bw),
        "a_w": jax.random.uniform(k3, (1, 2 * out_features), jnp.float32, -ba, ba),
        "a_b": jax.random.uniform(k4, (1,), jnp.float32, -ba, ba),
    }


def build_augmented_params(head_params):
    """Fold per-head W / attention vectors into one augmented weight matrix.

    proj = h @ W_aug + b_aug gives, per head:
      Wh               (columns [:HF])
      e_src = a_src.Wh + a_b   (columns [HF:HF+H])
      e_dst = a_dst.Wh         (columns [HF+H:])
    """
    fout = head_params[0]["w"].shape[0]
    w_cols, b_cols, src_w, src_b, dst_w, dst_b = [], [], [], [], [], []
    for p in head_params:
        w_t = p["w"].T                                # [Fin, F]
        wb = p["w_b"].reshape(1, fout)                # [1, F]
        a_src = p["a_w"][0, :fout].reshape(fout, 1)   # [F, 1]
        a_dst = p["a_w"][0, fout:].reshape(fout, 1)   # [F, 1]
        a_b = p["a_b"].reshape(1, 1)                  # [1, 1]
        w_cols.append(w_t)
        b_cols.append(wb)
        src_w.append(w_t @ a_src)                     # [Fin, 1]
        src_b.append(wb @ a_src + a_b)                # [1, 1]
        dst_w.append(w_t @ a_dst)                     # [Fin, 1]
        dst_b.append(wb @ a_dst)                      # [1, 1]
    w_aug = jnp.concatenate(w_cols + src_w + dst_w, axis=1)   # [Fin, HF+2H]
    b_aug = jnp.concatenate(b_cols + src_b + dst_b, axis=1)   # [1, HF+2H]
    return w_aug, b_aug


def gat_forward(x, adj, params, *, alpha, tq=None, tp=None):
    """GAT.forward: dropout(no-op) -> fused heads -> out layer (+elu+residual fused)."""
    adj_i8 = (adj > 0).astype(jnp.int8)               # 4x smaller DMA stream
    heads = params["heads"]
    nheads = len(heads)
    nhid = heads[0]["w"].shape[0]
    w1, b1 = build_augmented_params(heads)
    h1 = gat_attention_layer(x, adj_i8, w1, b1, nheads=nheads, fhead=nhid,
                             alpha=alpha, tq=tq, tp=tp, exact_softmax=False)
    out_p = params["out"]
    fout = out_p["w"].shape[0]
    w2, b2 = build_augmented_params([out_p])
    return gat_attention_layer(h1, adj_i8, w2, b2, nheads=1, fhead=fout,
                               alpha=alpha, residual=x, tq=tq, tp=tp,
                               exact_softmax=True)


# ---------------------------- pure-JAX reference ----------------------------
def _reference_layer(h, adj, p, *, alpha, concat):
    fout = p["w"].shape[0]
    Wh = h @ p["w"].T + p["w_b"]
    e = (Wh @ p["a_w"][0, :fout][:, None]
         + (Wh @ p["a_w"][0, fout:][:, None]).T + p["a_b"][0])
    e = jnp.where(e > 0, e, alpha * e)
    att = jax.nn.softmax(jnp.where(adj > 0, e, -9e15), axis=1)
    hp = att @ Wh
    return _elu(hp) if concat else hp


def _reference_forward(x, adj, params, *, alpha):
    h = jnp.concatenate([_reference_layer(x, adj, p, alpha=alpha, concat=True)
                         for p in params["heads"]], axis=1)
    o = _reference_layer(h, adj, params["out"], alpha=alpha, concat=False)
    return _elu(o) + x


def _make_inputs(key, n, nfeat, nhid, nheads, out_feat):
    kx, kadj, kparams = jax.random.split(key, 3)
    x = jax.random.normal(kx, (n, nfeat), jnp.float32)
    adj = jax.random.bernoulli(kadj, 0.5, (n, n)).astype(jnp.float32)
    adj = jnp.maximum(adj, jnp.eye(n, dtype=jnp.float32))      # self loops
    head_keys = jax.random.split(kparams, nheads + 1)
    params = {
        "heads": [init_layer_params(head_keys[i], nfeat, nhid) for i in range(nheads)],
        "out": init_layer_params(head_keys[nheads], nhid * nheads, out_feat),
    }
    return x, adj, params


if __name__ == "__main__":
    ALPHA = 0.2
    root = jax.random.PRNGKey(0)
    k_small, k_big = jax.random.split(root, 2)

    # ---- test 1: small graph (single row tile), shapes from the module spec ----
    # N=8 nodes, nfeat=16, nhid=8, nheads=4, out_feature=16 (== nfeat for residual)
    x, adj, params = _make_inputs(k_small, n=8, nfeat=16, nhid=8, nheads=4, out_feat=16)
    out = gat_forward(x, adj, params, alpha=ALPHA)
    jax.block_until_ready(out)
    assert out.shape == (8, 16) and out.dtype == jnp.float32
    ref = _reference_forward(x, adj, params, alpha=ALPHA)
    assert bool(jnp.all(jnp.isfinite(out)))
    # bf16 Wh / attention operands (f32 accumulation) + approx reciprocal in the
    # hidden layer -> ~1e-3..1e-2-level deviation from the pure-f32 reference.
    assert bool(jnp.allclose(out, ref, rtol=2e-2, atol=2e-2))

    # ---- test 2: multi-tile path (grid > 1) -- validates row tiling at scale ----
    xb, adjb, paramsb = _make_inputs(k_big, n=256, nfeat=16, nhid=8, nheads=4, out_feat=16)
    outb = gat_forward(xb, adjb, paramsb, alpha=ALPHA, tq=128, tp=128)
    jax.block_until_ready(outb)
    assert outb.shape == (256, 16) and outb.dtype == jnp.float32
    refb = _reference_forward(xb, adjb, paramsb, alpha=ALPHA)
    assert bool(jnp.all(jnp.isfinite(outb)))
    assert bool(jnp.allclose(outb, refb, rtol=2e-2, atol=2e-2))

    print("KERNEL_OK")
</pallas_src>

<mosaic_0001>
module attributes {stable_mosaic.version = 11 : i64} {
  func.func @gat_project_kernel(%arg0: i32, %arg1: memref<8x16xf32, #tpu.memory_space<vmem>>, %arg2: memref<16x40xf32, #tpu.memory_space<vmem>>, %arg3: memref<1x40xf32, #tpu.memory_space<vmem>>, %arg4: memref<8x40xf32, #tpu.memory_space<vmem>>) attributes {dimension_semantics = [#tpu.dimension_semantics<parallel>], iteration_bounds = array<i64: 1>, scalar_prefetch = 0 : i64, scratch_operands = 0 : i64, tpu.core_type = #tpu.core_type<tc>, window_params = [{transform_indices = @transform_0, window_bounds = array<i64: 8, 16>}, {pipeline_mode = #tpu.pipeline_mode<synchronous>, transform_indices = @transform_1, window_bounds = array<i64: 16, 40>}, {pipeline_mode = #tpu.pipeline_mode<synchronous>, transform_indices = @transform_2, window_bounds = array<i64: 1, 40>}, {transform_indices = @transform_3, window_bounds = array<i64: 8, 40>}]} {
    %c0 = arith.constant 0 : index
    %c0_0 = arith.constant 0 : index
    %0 = vector.load %arg1[%c0, %c0_0] : memref<8x16xf32, #tpu.memory_space<vmem>>, vector<8x16xf32>
    %c0_1 = arith.constant 0 : index
    %c0_2 = arith.constant 0 : index
    %1 = vector.load %arg2[%c0_1, %c0_2] : memref<16x40xf32, #tpu.memory_space<vmem>>, vector<16x40xf32>
    %cst = arith.constant dense<0.000000e+00> : vector<8x40xf32>
    %2 = tpu.matmul %0, %1, %cst {dimension_numbers = #tpu.dot_dimension_numbers<[1], [0], [0], [1], [0, 0, 1, 1], [], []>} : vector<8x16xf32>, vector<16x40xf32>, vector<8x40xf32> -> vector<8x40xf32>
    %c0_3 = arith.constant 0 : index
    %c0_4 = arith.constant 0 : index
    %3 = vector.load %arg3[%c0_3, %c0_4] : memref<1x40xf32, #tpu.memory_space<vmem>>, vector<1x40xf32>
    %4 = vector.broadcast %3 : vector<1x40xf32> to vector<8x40xf32>
    %5 = arith.addf %2, %4 : vector<8x40xf32>
    %c0_5 = arith.constant 0 : index
    %c0_6 = arith.constant 0 : index
    %6 = vector.load %arg4[%c0_5, %c0_6] : memref<8x40xf32, #tpu.memory_space<vmem>>, vector<8x40xf32>
    tpu.vector_store %arg4[%c0_5, %c0_6], %5 {strides = array<i32>} : memref<8x40xf32, #tpu.memory_space<vmem>>, vector<8x40xf32>,
    return
  }
  func.func @transform_0(%arg0: i32) -> (i32, i32) {
    %c0_i32 = arith.constant 0 : i32
    %c0_i32_0 = arith.constant 0 : i32
    return %arg0, %c0_i32 : i32, i32
  }
  func.func @transform_1(%arg0: i32) -> (i32, i32) {
    %c0_i32 = arith.constant 0 : i32
    %c0_i32_0 = arith.constant 0 : i32
    %c0_i32_1 = arith.constant 0 : i32
    return %c0_i32, %c0_i32_0 : i32, i32
  }
  func.func @transform_2(%arg0: i32) -> (i32, i32) {
    %c0_i32 = arith.constant 0 : i32
    %c0_i32_0 = arith.constant 0 : i32
    %c0_i32_1 = arith.constant 0 : i32
    return %c0_i32, %c0_i32_0 : i32, i32
  }
  func.func @transform_3(%arg0: i32) -> (i32, i32) {
    %c0_i32 = arith.constant 0 : i32
    %c0_i32_0 = arith.constant 0 : i32
    return %arg0, %c0_i32 : i32, i32
  }
}

</mosaic_0001>

<llo_original>
// kernel: tpu_custom_call.1
$region0: #{tpu_custom_call.1}
  #allocation0 [shape = 'u32[]', space=smem, size = 0x4, offset = 0x4, fixed_abs, tag = 'smem constant byte address 0x4 - core index']
  #allocation1 [shape = 'u32[144,128]{1,0:T(1,128)}', space=vmem, size = 0x12000, scoped, tag = 'internal scratch']
  %s0 = inlined_call_operand.hbm [shape: f32[8,16], index: 0, kind: input, shape index: {}]
  %s1 = inlined_call_operand.hbm [shape: f32[16,40], index: 1, kind: input, shape index: {}]
  %s2 = inlined_call_operand.vmem [shape: f32[1,40], index: 2, kind: input, shape index: {}]
  %s3 = inlined_call_operand.hbm [shape: f32[8,40], index: 3, kind: output, shape index: {}]
  %s4 = sld [smem:[#allocation0]]
  $region30: #{tpu_custom_call.1} parent=0
    _
  %s6 = ssub.s32 1, %s4
  %s7 = scalar_select 0, %s6, %s4
  $region1: #{tpu_custom_call.1} parent=0
    #allocation2 [shape = 'u8[4096]{0}', space=vmem, size = 0x1000, scoped, tag = 'input window, operand 0, single buffered']
    #allocation3 [shape = 's32[1]{0}', space=sflag, size = 0x4, scoped, tag = 'scoped memory for tpu_custom_call.1']
    #allocation4 [shape = 's32[1]{0}', space=sflag, size = 0x4, scoped, tag = 'scoped memory for tpu_custom_call.1']
    #allocation5 [shape = 'u8[8192]{0}', space=vmem, size = 0x2000, scoped, tag = 'input window, operand 1, single buffered']
    #allocation6 [shape = 's32[1]{0}', space=sflag, size = 0x4, scoped, tag = 'scoped memory for tpu_custom_call.1']
    #allocation7 [shape = 'u8[4096]{0}', space=vmem, size = 0x1000, scoped, tag = 'output window, operand 0, single buffered']
    %8 = vsyncpa [#allocation3], 0
    %9 = vsyncpa [#allocation6], 0
    %10 = vsyncpa [#allocation4], 0
    // Predicated region
    $region2: #{tpu_custom_call.1} parent=1 // pred_check
      _
    $region3: #{tpu_custom_call.1} parent=1 // pred_check_branch
      %12 = sbr.rel (0) target = $region5
    $region4: #{tpu_custom_call.1} parent=1 // pred_region
      %s14 = ssub.s32 128, 128
      %15 = vsyncadd [#allocation3], %s14
      %s17 = sshll.u32 [#allocation2], 4
      %s18 = int_to_ptr.vmem [resolvable:$true] %s17
      %20 = dma.hbm_to_vmem [thread:$0]  %s0, 128, %s18, [#allocation3]
    $region5: #{tpu_custom_call.1} parent=1 // pred_fallthru
      _
    // Predicated region
    $region6: #{tpu_custom_call.1} parent=1 // pred_check
      _
    $region7: #{tpu_custom_call.1} parent=1 // pred_check_branch
      %22 = sbr.rel (0) target = $region9
    $region8: #{tpu_custom_call.1} parent=1 // pred_region
      %s24 = ssub.s32 256, 256
      %25 = vsyncadd [#allocation6], %s24
      %s26 = sshll.u32 [#allocation5], 4
      %s27 = int_to_ptr.vmem [resolvable:$true] %s26
      %32 = dma.hbm_to_vmem [thread:$0]  %s1, 256, %s27, [#allocation6], 128, 128, 8
    $region9: #{tpu_custom_call.1} parent=1 // pred_fallthru
      _
    // Predicated region
    $region10: #{tpu_custom_call.1} parent=1 // pred_check
      _
    $region11: #{tpu_custom_call.1} parent=1 // pred_check_branch
      %34 = sbr.rel (0) target = $region13
    $region12: #{tpu_custom_call.1} parent=1 // pred_region
      _
    $region13: #{tpu_custom_call.1} parent=1 // pred_fallthru
      _
    // Predicated region
    $region14: #{tpu_custom_call.1} parent=1 // pred_check
      _
    $region15: #{tpu_custom_call.1} parent=1 // pred_check_branch
      %36 = sbr.rel (0) target = $region17
    $region16: #{tpu_custom_call.1} parent=1 // pred_region
      %37 = dma.done [#allocation3], 128
    $region17: #{tpu_custom_call.1} parent=1 // pred_fallthru
      _
    // Predicated region
    $region18: #{tpu_custom_call.1} parent=1 // pred_check
      _
    $region19: #{tpu_custom_call.1} parent=1 // pred_check_branch
      %39 = sbr.rel (0) target = $region21
    $region20: #{tpu_custom_call.1} parent=1 // pred_region
      %40 = dma.done [#allocation6], 256
    $region21: #{tpu_custom_call.1} parent=1 // pred_fallthru
      _
    %v41 = vld [vmem:[#allocation2] sm:$0xff]
    %v42 = vld [vmem:[#allocation5] sm:$0xff]
    %v43 = vld [vmem:[#allocation5 + $0x8] sm:$0xff]
    %v44 = vld [vmem:[%s2] sm:$0x1]
    %v46 = vlaneseq
    %v47 = vshrl.u32 %v46, 7
    %v48 = vsub.s32 0, %v47
    %v49 = vrot.slane %v44, %v48
    %vm51 = vcmask 130048
    %v53 = vsel %vm51, %v41, 0
    %55 = vmatprep.subr.mxu0 0.0
    %56 = vmatpush1.msra.mxu0 %v42
    %57 = vmatprep.subr.mxu0 0.0
    %58 = vmatpush1.msra.mxu0 %v43
    %59 = vmatprep.subr.mxu0 0.0
    %60 = vmatpush1.msra.mxu0 0.0
    %61 = vmatprep.subr.mxu0 0.0
    %62 = vmatpush1.msra.mxu0 0.0
    %63 = vmatprep.subr.mxu0 0.0
    %64 = vmatpush1.msra.mxu0 0.0
    %65 = vmatprep.subr.mxu0 0.0
    %66 = vmatpush1.msra.mxu0 0.0
    %67 = vmatprep.subr.mxu0 0.0
    %68 = vmatpush1.msra.mxu0 0.0
    %69 = vmatprep.subr.mxu0 0.0
    %70 = vmatpush1.msra.mxu0 0.0
    %71 = vmatprep.subr.mxu0 0.0
    %72 = vmatpush1.msra.mxu0 0.0
    %73 = vmatprep.subr.mxu0 0.0
    %74 = vmatpush1.msra.mxu0 0.0
    %75 = vmatprep.subr.mxu0 0.0
    %76 = vmatpush1.msra.mxu0 0.0
    %77 = vmatprep.subr.mxu0 0.0
    %78 = vmatpush1.msra.mxu0 0.0
    %79 = vmatprep.subr.mxu0 0.0
    %80 = vmatpush1.msra.mxu0 0.0
    %81 = vmatprep.subr.mxu0 0.0
    %82 = vmatpush1.msra.mxu0 0.0
    %83 = vmatprep.subr.mxu0 0.0
    %84 = vmatpush1.msra.mxu0 0.0
    %85 = vmatprep.subr.mxu0 0.0
    %86 = vmatpush1.msra.mxu0 0.0
    %87 = vmatprep.subr.mxu0 0.0
    %88 = vmatpush1.msra.mxu0 0.0
    %89 = vmatprep.subr.mxu0 0.0
    %90 = vmatpush1.msra.mxu0 0.0
    %91 = vmatprep.subr.mxu0 0.0
    %92 = vmatpush1.msra.mxu0 0.0
    %93 = vmatprep.subr.mxu0 0.0
    %94 = vmatpush1.msra.mxu0 0.0
    %95 = vmatprep.subr.mxu0 0.0
    %96 = vmatpush1.msra.mxu0 0.0
    %97 = vmatprep.subr.mxu0 0.0
    %98 = vmatpush1.msra.mxu0 0.0
    %99 = vmatprep.subr.mxu0 0.0
    %100 = vmatpush1.msra.mxu0 0.0
    %101 = vmatprep.subr.mxu0 0.0
    %102 = vmatpush1.msra.mxu0 0.0
    %103 = vmatprep.subr.mxu0 0.0
    %104 = vmatpush1.msra.mxu0 0.0
    %105 = vmatprep.subr.mxu0 0.0
    %106 = vmatpush1.msra.mxu0 0.0
    %107 = vmatprep.subr.mxu0 0.0
    %108 = vmatpush1.msra.mxu0 0.0
    %109 = vmatprep.subr.mxu0 0.0
    %110 = vmatpush1.msra.mxu0 0.0
    %111 = vmatprep.subr.mxu0 0.0
    %112 = vmatpush1.msra.mxu0 0.0
    %113 = vmatprep.subr.mxu0 0.0
    %114 = vmatpush1.msra.mxu0 0.0
    %115 = vmatprep.subr.mxu0 0.0
    %116 = vmatpush1.msra.mxu0 0.0
    %117 = vmatprep.subr.mxu0 0.0
    %118 = vmatpush1.msra.mxu0 0.0
    %119 = vmatprep.mubr.f32.mxu0 0.0
    %120 = vmatmul.mubr.f32.gmra.mrb[0].mxu0 %v53
    %v121 = vpop.f32.mrb[0].mxu0
    %v122 = vadd.f32 %v49, %v121
    %v123 = vpop.f32.mrb[0].mxu0
    %124 = vdwg.mxu0
    %vm125 = vcmask 326656
    %126 = vst.msk [vmem:[#allocation7] sm:$0xff] %vm125, %v122
    // Predicated region
    $region22: #{tpu_custom_call.1} parent=1 // pred_check
      _
    $region23: #{tpu_custom_call.1} parent=1 // pred_check_branch
      %128 = sbr.rel (0) target = $region25
    $region24: #{tpu_custom_call.1} parent=1 // pred_region
      %s130 = ssub.s32 128, 128
      %131 = vsyncadd [#allocation4], %s130
      %s133 = sshll.u32 [#allocation7], 4
      %s134 = int_to_ptr.vmem [resolvable:$true] %s133
      %136 = dma.vmem_to_hbm [thread:$0]  %s134, 128, %s3, [#allocation4]
    $region25: #{tpu_custom_call.1} parent=1 // pred_fallthru
      _
    // Predicated region
    $region26: #{tpu_custom_call.1} parent=1 // pred_check
      _
    $region27: #{tpu_custom_call.1} parent=1 // pred_check_branch
      %138 = sbr.rel (0) target = $region29
    $region28: #{tpu_custom_call.1} parent=1 // pred_region
      %139 = dma.done [#allocation4], 128
    $region29: #{tpu_custom_call.1} parent=1 // pred_fallthru
      _
    %140 = vsyncpa [#allocation3], 1
    %141 = vsyncpa [#allocation6], 1
    %142 = vsyncpa [#allocation4], 1

</llo_original>
